<compile_context>
chip_gen: v5e
topology: v5e:2x2
jax: 0.10.0
libtpu: 0.0.40
codegen_flags: <defaults>
</compile_context>

<pallas_src>
import math
import jax
import jax.numpy as jnp
from jax.experimental import pallas as pl
from jax.experimental.pallas import tpu as pltpu

HIDDEN = 256


def classifier_kernel(x_ref, w1_ref, b1_ref, w2_ref, b2_ref, o_ref):
    # fc: [TB, D] bf16 @ [D, 256] bf16 -> f32 accumulate
    h = jnp.dot(x_ref[...], w1_ref[...], preferred_element_type=jnp.float32)
    h = jnp.maximum(h + b1_ref[...], 0.0)                      # bias + ReLU in f32
    # fc2: [TB, 256] bf16 @ [256, C_pad] bf16 -> f32 accumulate
    logits = jnp.dot(h.astype(jnp.bfloat16), w2_ref[...],
                     preferred_element_type=jnp.float32)
    logits = logits + b2_ref[...]                              # padded classes -> -inf
    # numerically stable softmax over the class (lane) axis
    m = jnp.max(logits, axis=-1, keepdims=True)
    e = jnp.exp(logits - m)                                    # padded cols exp to 0
    denom = jnp.sum(e, axis=-1, keepdims=True)
    inv = pl.reciprocal(denom, approx=True)                    # EUP, not VPU divide
    o_ref[...] = (e * inv).astype(o_ref.dtype)


def classifier_forward(x, w1, b1, w2, b2, *, tb=256):
    """x: [B, D] f32, w1: [D, 256], b1: [256], w2: [256, C], b2: [C] -> [B, C] f32."""
    B, D = x.shape
    C = w2.shape[1]
    c_pad = max(128, pl.cdiv(C, 128) * 128)          # lane-dense output width
    b_pad = pl.cdiv(B, tb) * tb                      # whole number of batch tiles

    # bf16 MXU inputs; biases stay f32. Padded classes: zero weight cols, -inf bias.
    x_p = jnp.zeros((b_pad, D), jnp.bfloat16).at[:B].set(x.astype(jnp.bfloat16))
    w1_b = w1.astype(jnp.bfloat16)
    b1_r = b1.reshape(1, HIDDEN).astype(jnp.float32)
    w2_p = jnp.zeros((HIDDEN, c_pad), jnp.bfloat16).at[:, :C].set(w2.astype(jnp.bfloat16))
    b2_p = jnp.full((1, c_pad), -jnp.inf, jnp.float32).at[0, :C].set(b2.astype(jnp.float32))

    out = pl.pallas_call(
        classifier_kernel,
        out_shape=jax.ShapeDtypeStruct((b_pad, c_pad), jnp.float32),
        grid=(b_pad // tb,),
        in_specs=[
            pl.BlockSpec((tb, D), lambda i: (i, 0)),          # x: tiled over batch
            pl.BlockSpec((D, HIDDEN), lambda i: (0, 0)),      # w1: resident
            pl.BlockSpec((1, HIDDEN), lambda i: (0, 0)),      # b1: resident
            pl.BlockSpec((HIDDEN, c_pad), lambda i: (0, 0)),  # w2: resident
            pl.BlockSpec((1, c_pad), lambda i: (0, 0)),       # b2: resident
        ],
        out_specs=pl.BlockSpec((tb, c_pad), lambda i: (i, 0)),
        compiler_params=pltpu.CompilerParams(
            dimension_semantics=("parallel",)),               # megacore on v7x
    )(x_p, w1_b, b1_r, w2_p, b2_p)
    return out[:B, :C]


def xavier_normal(key, fan_in, fan_out):
    # matches torch.nn.init.xavier_normal_: std = sqrt(2 / (fan_in + fan_out))
    std = math.sqrt(2.0 / (fan_in + fan_out))
    # stored as [in, out] (transposed vs. PyTorch's [out, in]); symmetric dist.
    return std * jax.random.normal(key, (fan_in, fan_out), dtype=jnp.float32)


if __name__ == "__main__":
    # Small, deterministic example consistent with the module:
    # args.D = 32, args.num_classes = 10, batch = 8.
    B, D, num_classes = 8, 32, 10

    key = jax.random.PRNGKey(0)
    kx, kw1, kw2 = jax.random.split(key, 3)

    x = jax.random.normal(kx, (B, D), dtype=jnp.float32)

    w1 = xavier_normal(kw1, D, HIDDEN)
    b1 = jnp.zeros((HIDDEN,), dtype=jnp.float32)   # nn.Linear bias default (zeros here)
    w2 = xavier_normal(kw2, HIDDEN, num_classes)
    b2 = jnp.zeros((num_classes,), dtype=jnp.float32)

    out = classifier_forward(x, w1, b1, w2, b2)
    out = jax.block_until_ready(out)

    # reference check in plain JAX (f32); bf16 MXU + approx reciprocal loosen tol
    h_ref = jnp.maximum(x @ w1 + b1, 0.0)
    logits_ref = h_ref @ w2 + b2
    ref = jax.nn.softmax(logits_ref, axis=1)
    assert out.shape == (B, num_classes)
    assert jnp.allclose(out, ref, atol=2e-2), "mismatch vs reference"
    assert jnp.allclose(jnp.sum(out, axis=1), 1.0, atol=1e-2)

    print("KERNEL_OK")
</pallas_src>

<mosaic_0001>
module attributes {stable_mosaic.version = 11 : i64} {
  func.func @classifier_kernel(%arg0: i32, %arg1: memref<256x32xbf16, #tpu.memory_space<vmem>>, %arg2: memref<32x256xbf16, #tpu.memory_space<vmem>>, %arg3: memref<1x256xf32, #tpu.memory_space<vmem>>, %arg4: memref<256x128xbf16, #tpu.memory_space<vmem>>, %arg5: memref<1x128xf32, #tpu.memory_space<vmem>>, %arg6: memref<256x128xf32, #tpu.memory_space<vmem>>) attributes {dimension_semantics = [#tpu.dimension_semantics<parallel>], iteration_bounds = array<i64: 1>, scalar_prefetch = 0 : i64, scratch_operands = 0 : i64, tpu.core_type = #tpu.core_type<tc>, window_params = [{transform_indices = @transform_0, window_bounds = array<i64: 256, 32>}, {pipeline_mode = #tpu.pipeline_mode<synchronous>, transform_indices = @transform_1, window_bounds = array<i64: 32, 256>}, {pipeline_mode = #tpu.pipeline_mode<synchronous>, transform_indices = @transform_2, window_bounds = array<i64: 1, 256>}, {pipeline_mode = #tpu.pipeline_mode<synchronous>, transform_indices = @transform_3, window_bounds = array<i64: 256, 128>}, {pipeline_mode = #tpu.pipeline_mode<synchronous>, transform_indices = @transform_4, window_bounds = array<i64: 1, 128>}, {transform_indices = @transform_5, window_bounds = array<i64: 256, 128>}]} {
    %c0 = arith.constant 0 : index
    %c0_0 = arith.constant 0 : index
    %0 = vector.load %arg1[%c0, %c0_0] : memref<256x32xbf16, #tpu.memory_space<vmem>>, vector<256x32xbf16>
    %c0_1 = arith.constant 0 : index
    %c0_2 = arith.constant 0 : index
    %1 = vector.load %arg2[%c0_1, %c0_2] : memref<32x256xbf16, #tpu.memory_space<vmem>>, vector<32x256xbf16>
    %cst = arith.constant dense<0.000000e+00> : vector<256x256xf32>
    %2 = tpu.matmul %0, %1, %cst {dimension_numbers = #tpu.dot_dimension_numbers<[1], [0], [0], [1], [0, 0, 1, 1], [], []>} : vector<256x32xbf16>, vector<32x256xbf16>, vector<256x256xf32> -> vector<256x256xf32>
    %c0_3 = arith.constant 0 : index
    %c0_4 = arith.constant 0 : index
    %3 = vector.load %arg3[%c0_3, %c0_4] : memref<1x256xf32, #tpu.memory_space<vmem>>, vector<1x256xf32>
    %4 = vector.broadcast %3 : vector<1x256xf32> to vector<256x256xf32>
    %5 = arith.addf %2, %4 : vector<256x256xf32>
    %cst_5 = arith.constant 0.000000e+00 : f32
    %6 = vector.broadcast %cst_5 : f32 to vector<256x256xf32>
    %7 = arith.maximumf %5, %6 : vector<256x256xf32>
    %8 = arith.truncf %7 : vector<256x256xf32> to vector<256x256xbf16>
    %c0_6 = arith.constant 0 : index
    %c0_7 = arith.constant 0 : index
    %9 = vector.load %arg4[%c0_6, %c0_7] : memref<256x128xbf16, #tpu.memory_space<vmem>>, vector<256x128xbf16>
    %cst_8 = arith.constant dense<0.000000e+00> : vector<256x128xf32>
    %10 = tpu.matmul %8, %9, %cst_8 {dimension_numbers = #tpu.dot_dimension_numbers<[1], [0], [0], [1], [0, 0, 1, 1], [], []>} : vector<256x256xbf16>, vector<256x128xbf16>, vector<256x128xf32> -> vector<256x128xf32>
    %c0_9 = arith.constant 0 : index
    %c0_10 = arith.constant 0 : index
    %11 = vector.load %arg5[%c0_9, %c0_10] : memref<1x128xf32, #tpu.memory_space<vmem>>, vector<1x128xf32>
    %12 = vector.broadcast %11 : vector<1x128xf32> to vector<256x128xf32>
    %13 = arith.addf %10, %12 : vector<256x128xf32>
    %cst_11 = arith.constant dense<0xFF800000> : vector<256xf32>
    %14 = vector.multi_reduction <maximumf>, %13, %cst_11 [1] : vector<256x128xf32> to vector<256xf32>
    %15 = vector.shape_cast %14 : vector<256xf32> to vector<256x1xf32>
    %16 = vector.broadcast %15 : vector<256x1xf32> to vector<256x128xf32>
    %17 = arith.subf %13, %16 : vector<256x128xf32>
    %18 = math.exp %17 : vector<256x128xf32>
    %cst_12 = arith.constant dense<0.000000e+00> : vector<256xf32>
    %19 = vector.multi_reduction <add>, %18, %cst_12 [1] : vector<256x128xf32> to vector<256xf32>
    %20 = vector.shape_cast %19 : vector<256xf32> to vector<256x1xf32>
    %21 = tpu.reciprocal %20 {approx = true} : vector<256x1xf32> -> vector<256x1xf32>
    %22 = vector.broadcast %21 : vector<256x1xf32> to vector<256x128xf32>
    %23 = arith.mulf %18, %22 : vector<256x128xf32>
    %c0_13 = arith.constant 0 : index
    %c0_14 = arith.constant 0 : index
    %24 = vector.load %arg6[%c0_13, %c0_14] : memref<256x128xf32, #tpu.memory_space<vmem>>, vector<256x128xf32>
    tpu.vector_store %arg6[%c0_13, %c0_14], %23 {strides = array<i32>} : memref<256x128xf32, #tpu.memory_space<vmem>>, vector<256x128xf32>,
    return
  }
  func.func @transform_0(%arg0: i32) -> (i32, i32) {
    %c0_i32 = arith.constant 0 : i32
    %c0_i32_0 = arith.constant 0 : i32
    return %arg0, %c0_i32 : i32, i32
  }
  func.func @transform_1(%arg0: i32) -> (i32, i32) {
    %c0_i32 = arith.constant 0 : i32
    %c0_i32_0 = arith.constant 0 : i32
    %c0_i32_1 = arith.constant 0 : i32
    return %c0_i32, %c0_i32_0 : i32, i32
  }
  func.func @transform_2(%arg0: i32) -> (i32, i32) {
    %c0_i32 = arith.constant 0 : i32
    %c0_i32_0 = arith.constant 0 : i32
    %c0_i32_1 = arith.constant 0 : i32
    return %c0_i32, %c0_i32_0 : i32, i32
  }
  func.func @transform_3(%arg0: i32) -> (i32, i32) {
    %c0_i32 = arith.constant 0 : i32
    %c0_i32_0 = arith.constant 0 : i32
    %c0_i32_1 = arith.constant 0 : i32
    return %c0_i32, %c0_i32_0 : i32, i32
  }
  func.func @transform_4(%arg0: i32) -> (i32, i32) {
    %c0_i32 = arith.constant 0 : i32
    %c0_i32_0 = arith.constant 0 : i32
    %c0_i32_1 = arith.constant 0 : i32
    return %c0_i32, %c0_i32_0 : i32, i32
  }
  func.func @transform_5(%arg0: i32) -> (i32, i32) {
    %c0_i32 = arith.constant 0 : i32
    %c0_i32_0 = arith.constant 0 : i32
    return %arg0, %c0_i32 : i32, i32
  }
}

</mosaic_0001>

<llo_original>
// kernel: tpu_custom_call.1
$region0: #{tpu_custom_call.1}
  #allocation0 [shape = 'u32[]', space=smem, size = 0x4, offset = 0x4, fixed_abs, tag = 'smem constant byte address 0x4 - core index']
  #allocation1 [shape = 'u32[72,128]{1,0:T(1,128)}', space=vmem, size = 0x9000, scoped, tag = 'internal scratch']
  %s0 = inlined_call_operand.vmem [shape: bf16[256,32], index: 0, kind: input, shape index: {}]
  %s1 = inlined_call_operand.vmem [shape: bf16[32,256], index: 1, kind: input, shape index: {}]
  %s2 = inlined_call_operand.vmem [shape: f32[1,256], index: 2, kind: input, shape index: {}]
  %s3 = inlined_call_operand.vmem [shape: bf16[256,128], index: 3, kind: input, shape index: {}]
  %s4 = inlined_call_operand.vmem [shape: f32[1,128], index: 4, kind: input, shape index: {}]
  %s5 = inlined_call_operand.hbm [shape: f32[256,128], index: 5, kind: output, shape index: {}]
  %s6 = sld [smem:[#allocation0]]
  $region30: #{tpu_custom_call.1} parent=0
    _
  %s8 = ssub.s32 1, %s6
  %s9 = scalar_select 0, %s8, %s6
  $region1: #{tpu_custom_call.1} parent=0
    #allocation2 [shape = 'u8[131072]{0}', space=vmem, size = 0x20000, scoped, tag = 'output window, operand 0, single buffered']
    #allocation3 [shape = 's32[1]{0}', space=sflag, size = 0x4, scoped, tag = 'scoped memory for tpu_custom_call.1']
    %10 = vsyncpa [#allocation3], 0
    // Predicated region
    $region2: #{tpu_custom_call.1} parent=1 // pred_check
      _
    $region3: #{tpu_custom_call.1} parent=1 // pred_check_branch
      %12 = sbr.rel (0) target = $region5
    $region4: #{tpu_custom_call.1} parent=1 // pred_region
      _
    $region5: #{tpu_custom_call.1} parent=1 // pred_fallthru
      _
    // Predicated region
    $region6: #{tpu_custom_call.1} parent=1 // pred_check
      _
    $region7: #{tpu_custom_call.1} parent=1 // pred_check_branch
      %14 = sbr.rel (0) target = $region9
    $region8: #{tpu_custom_call.1} parent=1 // pred_region
      _
    $region9: #{tpu_custom_call.1} parent=1 // pred_fallthru
      _
    // Predicated region
    $region10: #{tpu_custom_call.1} parent=1 // pred_check
      _
    $region11: #{tpu_custom_call.1} parent=1 // pred_check_branch
      %16 = sbr.rel (0) target = $region13
    $region12: #{tpu_custom_call.1} parent=1 // pred_region
      _
    $region13: #{tpu_custom_call.1} parent=1 // pred_fallthru
      _
    // Predicated region
    $region14: #{tpu_custom_call.1} parent=1 // pred_check
      _
    $region15: #{tpu_custom_call.1} parent=1 // pred_check_branch
      %18 = sbr.rel (0) target = $region17
    $region16: #{tpu_custom_call.1} parent=1 // pred_region
      _
    $region17: #{tpu_custom_call.1} parent=1 // pred_fallthru
      _
    // Predicated region
    $region18: #{tpu_custom_call.1} parent=1 // pred_check
      _
    $region19: #{tpu_custom_call.1} parent=1 // pred_check_branch
      %20 = sbr.rel (0) target = $region21
    $region20: #{tpu_custom_call.1} parent=1 // pred_region
      _
    $region21: #{tpu_custom_call.1} parent=1 // pred_fallthru
      _
    %v22 = vld [vmem:[%s0] sm:$0xf]
    %v23 = vld [vmem:[%s0 + $0x4] sm:$0xf]
    %v24 = vld [vmem:[%s0 + $0x8] sm:$0xf]
    %v25 = vld [vmem:[%s0 + $0xc] sm:$0xf]
    %v26 = vld [vmem:[%s0 + $0x10] sm:$0xf]
    %v27 = vld [vmem:[%s0 + $0x14] sm:$0xf]
    %v28 = vld [vmem:[%s0 + $0x18] sm:$0xf]
    %v29 = vld [vmem:[%s0 + $0x1c] sm:$0xf]
    %v30 = vld [vmem:[%s0 + $0x20] sm:$0xf]
    %v31 = vld [vmem:[%s0 + $0x24] sm:$0xf]
    %v32 = vld [vmem:[%s0 + $0x28] sm:$0xf]
    %v33 = vld [vmem:[%s0 + $0x2c] sm:$0xf]
    %v34 = vld [vmem:[%s0 + $0x30] sm:$0xf]
    %v35 = vld [vmem:[%s0 + $0x34] sm:$0xf]
    %v36 = vld [vmem:[%s0 + $0x38] sm:$0xf]
    %v37 = vld [vmem:[%s0 + $0x3c] sm:$0xf]
    %v38 = vld [vmem:[%s0 + $0x40] sm:$0xf]
    %v39 = vld [vmem:[%s0 + $0x44] sm:$0xf]
    %v40 = vld [vmem:[%s0 + $0x48] sm:$0xf]
    %v41 = vld [vmem:[%s0 + $0x4c] sm:$0xf]
    %v42 = vld [vmem:[%s0 + $0x50] sm:$0xf]
    %v43 = vld [vmem:[%s0 + $0x54] sm:$0xf]
    %v44 = vld [vmem:[%s0 + $0x58] sm:$0xf]
    %v45 = vld [vmem:[%s0 + $0x5c] sm:$0xf]
    %v46 = vld [vmem:[%s0 + $0x60] sm:$0xf]
    %v47 = vld [vmem:[%s0 + $0x64] sm:$0xf]
    %v48 = vld [vmem:[%s0 + $0x68] sm:$0xf]
    %v49 = vld [vmem:[%s0 + $0x6c] sm:$0xf]
    %v50 = vld [vmem:[%s0 + $0x70] sm:$0xf]
    %v51 = vld [vmem:[%s0 + $0x74] sm:$0xf]
    %v52 = vld [vmem:[%s0 + $0x78] sm:$0xf]
    %v53 = vld [vmem:[%s0 + $0x7c] sm:$0xf]
    %v54 = vld [vmem:[%s1] sm:$0xff]
    %v55 = vld [vmem:[%s1 + $0x8] sm:$0xff]
    %v56 = vld [vmem:[%s1 + $0x10] sm:$0xff]
    %v57 = vld [vmem:[%s1 + $0x18] sm:$0xff]
    %v58 = vld [vmem:[%s2] sm:$0x3]
    %v60 = vperm.slane %v58, 0
    %v61 = vperm.slane %v58, 1
    %v96 = vunpack.c.l.b16 %v22
    %v97 = vunpack.c.l.b16 %v23
    %v98 = vunpack.c.l.b16 %v24
    %v99 = vunpack.c.l.b16 %v25
    %v100 = vunpack.c.l.b16 %v26
    %v101 = vunpack.c.l.b16 %v27
    %v102 = vunpack.c.l.b16 %v28
    %v103 = vunpack.c.l.b16 %v29
    %v104 = vunpack.c.l.b16 %v30
    %v105 = vunpack.c.l.b16 %v31
    %v106 = vunpack.c.l.b16 %v32
    %v107 = vunpack.c.l.b16 %v33
    %v108 = vunpack.c.l.b16 %v34
    %v109 = vunpack.c.l.b16 %v35
    %v110 = vunpack.c.l.b16 %v36
    %v111 = vunpack.c.l.b16 %v37
    %v112 = vunpack.c.l.b16 %v38
    %v113 = vunpack.c.l.b16 %v39
    %v114 = vunpack.c.l.b16 %v40
    %v115 = vunpack.c.l.b16 %v41
    %v116 = vunpack.c.l.b16 %v42
    %v117 = vunpack.c.l.b16 %v43
    %v118 = vunpack.c.l.b16 %v44
    %v119 = vunpack.c.l.b16 %v45
    %v120 = vunpack.c.l.b16 %v46
    %v121 = vunpack.c.l.b16 %v47
    %v122 = vunpack.c.l.b16 %v48
    %v123 = vunpack.c.l.b16 %v49
    %v124 = vunpack.c.l.b16 %v50
    %v125 = vunpack.c.l.b16 %v51
    %v126 = vunpack.c.l.b16 %v52
    %v127 = vunpack.c.l.b16 %v53
    %v128 = vpack.c.b16 %v97, %v96
    %v129 = vpack.c.b16 %v99, %v98
    %v130 = vpack.c.b16 %v101, %v100
    %v131 = vpack.c.b16 %v103, %v102
    %v132 = vpack.c.b16 %v105, %v104
    %v133 = vpack.c.b16 %v107, %v106
    %v134 = vpack.c.b16 %v109, %v108
    %v135 = vpack.c.b16 %v111, %v110
    %v136 = vpack.c.b16 %v113, %v112
    %v137 = vpack.c.b16 %v115, %v114
    %v138 = vpack.c.b16 %v117, %v116
    %v139 = vpack.c.b16 %v119, %v118
    %v140 = vpack.c.b16 %v121, %v120
    %v141 = vpack.c.b16 %v123, %v122
    %v142 = vpack.c.b16 %v125, %v124
    %v143 = vpack.c.b16 %v127, %v126
    %v148 = vunpack.c.l.b16 %v54
    %v149 = vunpack.c.h.b16 %v54
    %v150 = vunpack.c.l.b16 %v55
    %v151 = vunpack.c.h.b16 %v55
    %v152 = vunpack.c.l.b16 %v56
    %v153 = vunpack.c.h.b16 %v56
    %v154 = vunpack.c.l.b16 %v57
    %v155 = vunpack.c.h.b16 %v57
    %v156 = vpack.c.b16 %v150, %v148
    %v157 = vpack.c.b16 %v151, %v149
    %v158 = vpack.c.b16 %v154, %v152
    %v159 = vpack.c.b16 %v155, %v153
    %vm164 = vcmask 261120
    %v166 = vsel %vm164, %v128, 0
    %v169 = vsel %vm164, %v129, 0
    %v172 = vsel %vm164, %v130, 0
    %v175 = vsel %vm164, %v131, 0
    %v178 = vsel %vm164, %v132, 0
    %v181 = vsel %vm164, %v133, 0
    %v184 = vsel %vm164, %v134, 0
    %v187 = vsel %vm164, %v135, 0
    %v190 = vsel %vm164, %v136, 0
    %v193 = vsel %vm164, %v137, 0
    %v196 = vsel %vm164, %v138, 0
    %v199 = vsel %vm164, %v139, 0
    %v202 = vsel %vm164, %v140, 0
    %v205 = vsel %vm164, %v141, 0
    %v208 = vsel %vm164, %v142, 0
    %v211 = vsel %vm164, %v143, 0
    %213 = vmatpush.bf16.msra.mxu0 0
    %214 = vmatpush.bf16.msra.mxu0 0
    %215 = vmatpush.bf16.msra.mxu0 0
    %216 = vmatpush.bf16.msra.mxu0 0
    %217 = vmatpush.bf16.msra.mxu0 0
    %218 = vmatpush.bf16.msra.mxu0 0
    %219 = vmatpush.bf16.msra.mxu0 %v158
    %220 = vmatpush.bf16.msra.mxu0 %v156
    %221 = vmatmul.bf16.gmra.mxu0 %v166
    %v222 = vpop.f32.mrf.mxu0
    %v223 = vadd.f32 %v60, %v222
    %v224 = vpop.f32.mrf.mxu0
    %v225 = vadd.f32 %v60, %v224
    %226 = vmatmul.bf16.gmra.mxu0 %v169
    %v227 = vpop.f32.mrf.mxu0
    %v228 = vadd.f32 %v60, %v227
    %v229 = vpop.f32.mrf.mxu0
    %v230 = vadd.f32 %v60, %v229
    %231 = vmatmul.bf16.gmra.mxu0 %v172
    %v232 = vpop.f32.mrf.mxu0
    %v233 = vadd.f32 %v60, %v232
    %v234 = vpop.f32.mrf.mxu0
    %v235 = vadd.f32 %v60, %v234
    %236 = vmatmul.bf16.gmra.mxu0 %v175
    %v237 = vpop.f32.mrf.mxu0
    %v238 = vadd.f32 %v60, %v237
    %v239 = vpop.f32.mrf.mxu0
    %v240 = vadd.f32 %v60, %v239
    %241 = vmatmul.bf16.gmra.mxu0 %v178
    %v242 = vpop.f32.mrf.mxu0
    %v243 = vadd.f32 %v60, %v242
    %v244 = vpop.f32.mrf.mxu0
    %v245 = vadd.f32 %v60, %v244
    %246 = vmatmul.bf16.gmra.mxu0 %v181
    %v247 = vpop.f32.mrf.mxu0
    %v248 = vadd.f32 %v60, %v247
    %v249 = vpop.f32.mrf.mxu0
    %v250 = vadd.f32 %v60, %v249
    %251 = vmatmul.bf16.gmra.mxu0 %v184
    %v252 = vpop.f32.mrf.mxu0
    %v253 = vadd.f32 %v60, %v252
    %v254 = vpop.f32.mrf.mxu0
    %v255 = vadd.f32 %v60, %v254
    %256 = vmatmul.bf16.gmra.mxu0 %v187
    %v257 = vpop.f32.mrf.mxu0
    %v258 = vadd.f32 %v60, %v257
    %v259 = vpop.f32.mrf.mxu0
    %v260 = vadd.f32 %v60, %v259
    %261 = vmatmul.bf16.gmra.mxu0 %v190
    %v262 = vpop.f32.mrf.mxu0
    %v263 = vadd.f32 %v60, %v262
    %v264 = vpop.f32.mrf.mxu0
    %v265 = vadd.f32 %v60, %v264
    %266 = vmatmul.bf16.gmra.mxu0 %v193
    %v267 = vpop.f32.mrf.mxu0
    %v268 = vadd.f32 %v60, %v267
    %v269 = vpop.f32.mrf.mxu0
    %v270 = vadd.f32 %v60, %v269
    %271 = vmatmul.bf16.gmra.mxu0 %v196
    %v272 = vpop.f32.mrf.mxu0
    %v273 = vadd.f32 %v60, %v272
    %v274 = vpop.f32.mrf.mxu0
    %v275 = vadd.f32 %v60, %v274
    %276 = vmatmul.bf16.gmra.mxu0 %v199
    %v277 = vpop.f32.mrf.mxu0
    %v278 = vadd.f32 %v60, %v277
    %v279 = vpop.f32.mrf.mxu0
    %v280 = vadd.f32 %v60, %v279
    %281 = vmatmul.bf16.gmra.mxu0 %v202
    %v282 = vpop.f32.mrf.mxu0
    %v283 = vadd.f32 %v60, %v282
    %v284 = vpop.f32.mrf.mxu0
    %v285 = vadd.f32 %v60, %v284
    %286 = vmatmul.bf16.gmra.mxu0 %v205
    %v287 = vpop.f32.mrf.mxu0
    %v288 = vadd.f32 %v60, %v287
    %v289 = vpop.f32.mrf.mxu0
    %v290 = vadd.f32 %v60, %v289
    %291 = vmatmul.bf16.gmra.mxu0 %v208
    %v292 = vpop.f32.mrf.mxu0
    %v293 = vadd.f32 %v60, %v292
    %v294 = vpop.f32.mrf.mxu0
    %v295 = vadd.f32 %v60, %v294
    %296 = vmatmul.bf16.gmra.mxu0 %v211
    %v297 = vpop.f32.mrf.mxu0
    %v298 = vadd.f32 %v60, %v297
    %v299 = vpop.f32.mrf.mxu0
    %v300 = vadd.f32 %v60, %v299
    %301 = vdwg.mxu0
    %302 = vmatpush.bf16.msra.mxu0 0
    %303 = vmatpush.bf16.msra.mxu0 0
    %304 = vmatpush.bf16.msra.mxu0 0
    %305 = vmatpush.bf16.msra.mxu0 0
    %306 = vmatpush.bf16.msra.mxu0 0
    %307 = vmatpush.bf16.msra.mxu0 0
    %308 = vmatpush.bf16.msra.mxu0 %v159
    %309 = vmatpush.bf16.msra.mxu0 %v157
    %310 = vmatmul.bf16.gmra.mxu0 %v166
    %v311 = vpop.f32.mrf.mxu0
    %v312 = vadd.f32 %v61, %v311
    %v313 = vpop.f32.mrf.mxu0
    %v314 = vadd.f32 %v61, %v313
    %315 = vmatmul.bf16.gmra.mxu0 %v169
    %v316 = vpop.f32.mrf.mxu0
    %v317 = vadd.f32 %v61, %v316
    %v318 = vpop.f32.mrf.mxu0
    %v319 = vadd.f32 %v61, %v318
    %320 = vmatmul.bf16.gmra.mxu0 %v172
    %v321 = vpop.f32.mrf.mxu0
    %v322 = vadd.f32 %v61, %v321
    %v323 = vpop.f32.mrf.mxu0
    %v324 = vadd.f32 %v61, %v323
    %325 = vmatmul.bf16.gmra.mxu0 %v175
    %v326 = vpop.f32.mrf.mxu0
    %v327 = vadd.f32 %v61, %v326
    %v328 = vpop.f32.mrf.mxu0
    %v329 = vadd.f32 %v61, %v328
    %330 = vmatmul.bf16.gmra.mxu0 %v178
    %v331 = vpop.f32.mrf.mxu0
    %v332 = vadd.f32 %v61, %v331
    %v333 = vpop.f32.mrf.mxu0
    %v334 = vadd.f32 %v61, %v333
    %335 = vmatmul.bf16.gmra.mxu0 %v181
    %v336 = vpop.f32.mrf.mxu0
    %v337 = vadd.f32 %v61, %v336
    %v338 = vpop.f32.mrf.mxu0
    %v339 = vadd.f32 %v61, %v338
    %340 = vmatmul.bf16.gmra.mxu0 %v184
    %v341 = vpop.f32.mrf.mxu0
    %v342 = vadd.f32 %v61, %v341
    %v343 = vpop.f32.mrf.mxu0
    %v344 = vadd.f32 %v61, %v343
    %345 = vmatmul.bf16.gmra.mxu0 %v187
    %v346 = vpop.f32.mrf.mxu0
    %v347 = vadd.f32 %v61, %v346
    %v348 = vpop.f32.mrf.mxu0
    %v349 = vadd.f32 %v61, %v348
    %350 = vmatmul.bf16.gmra.mxu0 %v190
    %v351 = vpop.f32.mrf.mxu0
    %v352 = vadd.f32 %v61, %v351
    %v353 = vpop.f32.mrf.mxu0
    %v354 = vadd.f32 %v61, %v353
    %355 = vmatmul.bf16.gmra.mxu0 %v193
    %v356 = vpop.f32.mrf.mxu0
    %v357 = vadd.f32 %v61, %v356
    %v358 = vpop.f32.mrf.mxu0
    %v359 = vadd.f32 %v61, %v358
    %360 = vmatmul.bf16.gmra.mxu0 %v196
    %v361 = vpop.f32.mrf.mxu0
    %v362 = vadd.f32 %v61, %v361
    %v363 = vpop.f32.mrf.mxu0
    %v364 = vadd.f32 %v61, %v363
    %365 = vmatmul.bf16.gmra.mxu0 %v199
    %v366 = vpop.f32.mrf.mxu0
    %v367 = vadd.f32 %v61, %v366
    %v368 = vpop.f32.mrf.mxu0
    %v369 = vadd.f32 %v61, %v368
    %370 = vmatmul.bf16.gmra.mxu0 %v202
    %v371 = vpop.f32.mrf.mxu0
    %v372 = vadd.f32 %v61, %v371
    %v373 = vpop.f32.mrf.mxu0
    %v374 = vadd.f32 %v61, %v373
    %375 = vmatmul.bf16.gmra.mxu0 %v205
    %v376 = vpop.f32.mrf.mxu0
    %v377 = vadd.f32 %v61, %v376
    %v378 = vpop.f32.mrf.mxu0
    %v379 = vadd.f32 %v61, %v378
    %380 = vmatmul.bf16.gmra.mxu0 %v208
    %v381 = vpop.f32.mrf.mxu0
    %v382 = vadd.f32 %v61, %v381
    %v383 = vpop.f32.mrf.mxu0
    %v384 = vadd.f32 %v61, %v383
    %385 = vmatmul.bf16.gmra.mxu0 %v211
    %v386 = vpop.f32.mrf.mxu0
    %v387 = vadd.f32 %v61, %v386
    %v388 = vpop.f32.mrf.mxu0
    %v389 = vadd.f32 %v61, %v388
    %390 = vdwg.mxu0
    %v391 = vmax.f32 %v223, 0.0
    %v392 = vmax.f32 %v312, 0.0
    %v393 = vmax.f32 %v225, 0.0
    %v394 = vmax.f32 %v314, 0.0
    %v395 = vmax.f32 %v228, 0.0
    %v396 = vmax.f32 %v317, 0.0
    %v397 = vmax.f32 %v230, 0.0
    %v398 = vmax.f32 %v319, 0.0
    %v399 = vmax.f32 %v233, 0.0
    %v400 = vmax.f32 %v322, 0.0
    %v401 = vmax.f32 %v235, 0.0
    %v402 = vmax.f32 %v324, 0.0
    %v403 = vmax.f32 %v238, 0.0
    %v404 = vmax.f32 %v327, 0.0
    %v405 = vmax.f32 %v240, 0.0
    %v406 = vmax.f32 %v329, 0.0
    %v407 = vmax.f32 %v243, 0.0
    %v408 = vmax.f32 %v332, 0.0
    %v409 = vmax.f32 %v245, 0.0
    %v410 = vmax.f32 %v334, 0.0
    %v411 = vmax.f32 %v248, 0.0
    %v412 = vmax.f32 %v337, 0.0
    %v413 = vmax.f32 %v250, 0.0
    %v414 = vmax.f32 %v339, 0.0
    %v415 = vmax.f32 %v253, 0.0
    %v416 = vmax.f32 %v342, 0.0
    %v417 = vmax.f32 %v255, 0.0
    %v418 = vmax.f32 %v344, 0.0
    %v419 = vmax.f32 %v258, 0.0
    %v420 = vmax.f32 %v347, 0.0
    %v421 = vmax.f32 %v260, 0.0
    %v422 = vmax.f32 %v349, 0.0
    %v423 = vmax.f32 %v263, 0.0
    %v424 = vmax.f32 %v352, 0.0
    %v425 = vmax.f32 %v265, 0.0
    %v426 = vmax.f32 %v354, 0.0
    %v427 = vmax.f32 %v268, 0.0
    %v428 = vmax.f32 %v357, 0.0
    %v429 = vmax.f32 %v270, 0.0
    %v430 = vmax.f32 %v359, 0.0
    %v431 = vmax.f32 %v273, 0.0
    %v432 = vmax.f32 %v362, 0.0
    %v433 = vmax.f32 %v275, 0.0
    %v434 = vmax.f32 %v364, 0.0
    %v435 = vmax.f32 %v278, 0.0
    %v436 = vmax.f32 %v367, 0.0
    %v437 = vmax.f32 %v280, 0.0
    %v438 = vmax.f32 %v369, 0.0
    %v439 = vmax.f32 %v283, 0.0
    %v440 = vmax.f32 %v372, 0.0
    %v441 = vmax.f32 %v285, 0.0
    %v442 = vmax.f32 %v374, 0.0
    %v443 = vmax.f32 %v288, 0.0
    %v444 = vmax.f32 %v377, 0.0
    %v445 = vmax.f32 %v290, 0.0
    %v446 = vmax.f32 %v379, 0.0
    %v447 = vmax.f32 %v293, 0.0
    %v448 = vmax.f32 %v382, 0.0
    %v449 = vmax.f32 %v295, 0.0
    %v450 = vmax.f32 %v384, 0.0
    %v451 = vmax.f32 %v298, 0.0
    %v452 = vmax.f32 %v387, 0.0
    %v453 = vmax.f32 %v300, 0.0
    %v454 = vmax.f32 %v389, 0.0
    %v455 = vpack.c.bf16 %v393, %v391
    %v456 = vpack.c.bf16 %v394, %v392
    %v457 = vpack.c.bf16 %v397, %v395
    %v458 = vpack.c.bf16 %v398, %v396
    %v459 = vpack.c.bf16 %v401, %v399
    %v460 = vpack.c.bf16 %v402, %v400
    %v461 = vpack.c.bf16 %v405, %v403
    %v462 = vpack.c.bf16 %v406, %v404
    %v463 = vpack.c.bf16 %v409, %v407
    %v464 = vpack.c.bf16 %v410, %v408
    %v465 = vpack.c.bf16 %v413, %v411
    %v466 = vpack.c.bf16 %v414, %v412
    %v467 = vpack.c.bf16 %v417, %v415
    %v468 = vpack.c.bf16 %v418, %v416
    %v469 = vpack.c.bf16 %v421, %v419
    %v470 = vpack.c.bf16 %v422, %v420
    %v471 = vpack.c.bf16 %v425, %v423
    %v472 = vpack.c.bf16 %v426, %v424
    %v473 = vpack.c.bf16 %v429, %v427
    %v474 = vpack.c.bf16 %v430, %v428
    %v475 = vpack.c.bf16 %v433, %v431
    %v476 = vpack.c.bf16 %v434, %v432
    %v477 = vpack.c.bf16 %v437, %v435
    %v478 = vpack.c.bf16 %v438, %v436
    %v479 = vpack.c.bf16 %v441, %v439
    %v480 = vpack.c.bf16 %v442, %v440
    %v481 = vpack.c.bf16 %v445, %v443
    %v482 = vpack.c.bf16 %v446, %v444
    %v483 = vpack.c.bf16 %v449, %v447
    %v484 = vpack.c.bf16 %v450, %v448
    %v485 = vpack.c.bf16 %v453, %v451
    %v486 = vpack.c.bf16 %v454, %v452
    %v487 = vld [vmem:[%s3] sm:$0xf]
    %v488 = vld [vmem:[%s3 + $0x4] sm:$0xf]
    %v489 = vld [vmem:[%s3 + $0x8] sm:$0xf]
    %v490 = vld [vmem:[%s3 + $0xc] sm:$0xf]
    %v491 = vld [vmem:[%s3 + $0x10] sm:$0xf]
    %v492 = vld [vmem:[%s3 + $0x14] sm:$0xf]
    %v493 = vld [vmem:[%s3 + $0x18] sm:$0xf]
    %v494 = vld [vmem:[%s3 + $0x1c] sm:$0xf]
    %v495 = vld [vmem:[%s3 + $0x20] sm:$0xf]
    %v496 = vld [vmem:[%s3 + $0x24] sm:$0xf]
    %v497 = vld [vmem:[%s3 + $0x28] sm:$0xf]
    %v498 = vld [vmem:[%s3 + $0x2c] sm:$0xf]
    %v499 = vld [vmem:[%s3 + $0x30] sm:$0xf]
    %v500 = vld [vmem:[%s3 + $0x34] sm:$0xf]
    %v501 = vld [vmem:[%s3 + $0x38] sm:$0xf]
    %v502 = vld [vmem:[%s3 + $0x3c] sm:$0xf]
    %v503 = vld [vmem:[%s3 + $0x40] sm:$0xf]
    %v504 = vld [vmem:[%s3 + $0x44] sm:$0xf]
    %v505 = vld [vmem:[%s3 + $0x48] sm:$0xf]
    %v506 = vld [vmem:[%s3 + $0x4c] sm:$0xf]
    %v507 = vld [vmem:[%s3 + $0x50] sm:$0xf]
    %v508 = vld [vmem:[%s3 + $0x54] sm:$0xf]
    %v509 = vld [vmem:[%s3 + $0x58] sm:$0xf]
    %v510 = vld [vmem:[%s3 + $0x5c] sm:$0xf]
    %v511 = vld [vmem:[%s3 + $0x60] sm:$0xf]
    %v512 = vld [vmem:[%s3 + $0x64] sm:$0xf]
    %v513 = vld [vmem:[%s3 + $0x68] sm:$0xf]
    %v514 = vld [vmem:[%s3 + $0x6c] sm:$0xf]
    %v515 = vld [vmem:[%s3 + $0x70] sm:$0xf]
    %v516 = vld [vmem:[%s3 + $0x74] sm:$0xf]
    %v517 = vld [vmem:[%s3 + $0x78] sm:$0xf]
    %v518 = vld [vmem:[%s3 + $0x7c] sm:$0xf]
    %v519 = vld [vmem:[%s4] sm:$0x1]
    %v521 = vperm.slane %v519, 0
    %v555 = vunpack.c.l.b16 %v487
    %v556 = vunpack.c.l.b16 %v488
    %v557 = vunpack.c.l.b16 %v489
    %v558 = vunpack.c.l.b16 %v490
    %v559 = vunpack.c.l.b16 %v491
    %v560 = vunpack.c.l.b16 %v492
    %v561 = vunpack.c.l.b16 %v493
    %v562 = vunpack.c.l.b16 %v494
    %v563 = vunpack.c.l.b16 %v495
    %v564 = vunpack.c.l.b16 %v496
    %v565 = vunpack.c.l.b16 %v497
    %v566 = vunpack.c.l.b16 %v498
    %v567 = vunpack.c.l.b16 %v499
    %v568 = vunpack.c.l.b16 %v500
    %v569 = vunpack.c.l.b16 %v501
    %v570 = vunpack.c.l.b16 %v502
    %v571 = vunpack.c.l.b16 %v503
    %v572 = vunpack.c.l.b16 %v504
    %v573 = vunpack.c.l.b16 %v505
    %v574 = vunpack.c.l.b16 %v506
    %v575 = vunpack.c.l.b16 %v507
    %v576 = vunpack.c.l.b16 %v508
    %v577 = vunpack.c.l.b16 %v509
    %v578 = vunpack.c.l.b16 %v510
    %v579 = vunpack.c.l.b16 %v511
    %v580 = vunpack.c.l.b16 %v512
    %v581 = vunpack.c.l.b16 %v513
    %v582 = vunpack.c.l.b16 %v514
    %v583 = vunpack.c.l.b16 %v515
    %v584 = vunpack.c.l.b16 %v516
    %v585 = vunpack.c.l.b16 %v517
    %v586 = vunpack.c.l.b16 %v518
    %v587 = vpack.c.b16 %v556, %v555
    %v588 = vpack.c.b16 %v558, %v557
    %v589 = vpack.c.b16 %v560, %v559
    %v590 = vpack.c.b16 %v562, %v561
    %v591 = vpack.c.b16 %v564, %v563
    %v592 = vpack.c.b16 %v566, %v565
    %v593 = vpack.c.b16 %v568, %v567
    %v594 = vpack.c.b16 %v570, %v569
    %v595 = vpack.c.b16 %v572, %v571
    %v596 = vpack.c.b16 %v574, %v573
    %v597 = vpack.c.b16 %v576, %v575
    %v598 = vpack.c.b16 %v578, %v577
    %v599 = vpack.c.b16 %v580, %v579
    %v600 = vpack.c.b16 %v582, %v581
    %v601 = vpack.c.b16 %v584, %v583
    %v602 = vpack.c.b16 %v586, %v585
    %619 = vmatpush.bf16.msra.mxu0 %v594
    %620 = vmatpush.bf16.msra.mxu0 %v593
    %621 = vmatpush.bf16.msra.mxu0 %v592
    %622 = vmatpush.bf16.msra.mxu0 %v591
    %623 = vmatpush.bf16.msra.mxu0 %v590
    %624 = vmatpush.bf16.msra.mxu0 %v589
    %625 = vmatpush.bf16.msra.mxu0 %v588
    %626 = vmatpush.bf16.msra.mxu0 %v587
    %627 = vmatmul.bf16.gmra.mxu0 %v455
    %v628 = vpop.f32.mrf.mxu0
    %v629 = vadd.f32 %v521, %v628
    %v630 = vpop.f32.mrf.mxu0
    %v631 = vadd.f32 %v521, %v630
    %632 = vmatmul.bf16.gmra.mxu0 %v457
    %v633 = vpop.f32.mrf.mxu0
    %v634 = vadd.f32 %v521, %v633
    %v635 = vpop.f32.mrf.mxu0
    %v636 = vadd.f32 %v521, %v635
    %637 = vmatmul.bf16.gmra.mxu0 %v459
    %v638 = vpop.f32.mrf.mxu0
    %v639 = vadd.f32 %v521, %v638
    %v640 = vpop.f32.mrf.mxu0
    %v641 = vadd.f32 %v521, %v640
    %642 = vmatmul.bf16.gmra.mxu0 %v461
    %v643 = vpop.f32.mrf.mxu0
    %v644 = vadd.f32 %v521, %v643
    %v645 = vpop.f32.mrf.mxu0
    %v646 = vadd.f32 %v521, %v645
    %647 = vmatmul.bf16.gmra.mxu0 %v463
    %v648 = vpop.f32.mrf.mxu0
    %v649 = vadd.f32 %v521, %v648
    %v650 = vpop.f32.mrf.mxu0
    %v651 = vadd.f32 %v521, %v650
    %652 = vmatmul.bf16.gmra.mxu0 %v465
    %v653 = vpop.f32.mrf.mxu0
    %v654 = vadd.f32 %v521, %v653
    %v655 = vpop.f32.mrf.mxu0
    %v656 = vadd.f32 %v521, %v655
    %657 = vmatmul.bf16.gmra.mxu0 %v467
    %v658 = vpop.f32.mrf.mxu0
    %v659 = vadd.f32 %v521, %v658
    %v660 = vpop.f32.mrf.mxu0
    %v661 = vadd.f32 %v521, %v660
    %662 = vmatmul.bf16.gmra.mxu0 %v469
    %v663 = vpop.f32.mrf.mxu0
    %v664 = vadd.f32 %v521, %v663
    %v665 = vpop.f32.mrf.mxu0
    %v666 = vadd.f32 %v521, %v665
    %667 = vmatmul.bf16.gmra.mxu0 %v471
    %v668 = vpop.f32.mrf.mxu0
    %v669 = vadd.f32 %v521, %v668
    %v670 = vpop.f32.mrf.mxu0
    %v671 = vadd.f32 %v521, %v670
    %672 = vmatmul.bf16.gmra.mxu0 %v473
    %v673 = vpop.f32.mrf.mxu0
    %v674 = vadd.f32 %v521, %v673
    %v675 = vpop.f32.mrf.mxu0
    %v676 = vadd.f32 %v521, %v675
    %677 = vmatmul.bf16.gmra.mxu0 %v475
    %v678 = vpop.f32.mrf.mxu0
    %v679 = vadd.f32 %v521, %v678
    %v680 = vpop.f32.mrf.mxu0
    %v681 = vadd.f32 %v521, %v680
    %682 = vmatmul.bf16.gmra.mxu0 %v477
    %v683 = vpop.f32.mrf.mxu0
    %v684 = vadd.f32 %v521, %v683
    %v685 = vpop.f32.mrf.mxu0
    %v686 = vadd.f32 %v521, %v685
    %687 = vmatmul.bf16.gmra.mxu0 %v479
    %v688 = vpop.f32.mrf.mxu0
    %v689 = vadd.f32 %v521, %v688
    %v690 = vpop.f32.mrf.mxu0
    %v691 = vadd.f32 %v521, %v690
    %692 = vmatmul.bf16.gmra.mxu0 %v481
    %v693 = vpop.f32.mrf.mxu0
    %v694 = vadd.f32 %v521, %v693
    %v695 = vpop.f32.mrf.mxu0
    %v696 = vadd.f32 %v521, %v695
    %697 = vmatmul.bf16.gmra.mxu0 %v483
    %v698 = vpop.f32.mrf.mxu0
    %v699 = vadd.f32 %v521, %v698
    %v700 = vpop.f32.mrf.mxu0
    %v701 = vadd.f32 %v521, %v700
    %702 = vmatmul.bf16.gmra.mxu0 %v485
    %v703 = vpop.f32.mrf.mxu0
    %v704 = vadd.f32 %v521, %v703
    %v705 = vpop.f32.mrf.mxu0
    %v706 = vadd.f32 %v521, %v705
    %707 = vdwg.mxu0
    %708 = vmatpush.bf16.msra.mxu0 %v602
    %709 = vmatpush.bf16.msra.mxu0 %v601
    %710 = vmatpush.bf16.msra.mxu0 %v600
    %711 = vmatpush.bf16.msra.mxu0 %v599
    %712 = vmatpush.bf16.msra.mxu0 %v598
    %713 = vmatpush.bf16.msra.mxu0 %v597
    %714 = vmatpush.bf16.msra.mxu0 %v596
    %715 = vmatpush.bf16.msra.mxu0 %v595
    %716 = vmatmul.bf16.gmra.mxu0 %v456
    %v717 = vpop.f32.mrf.mxu0
    %v718 = vadd.f32 %v629, %v717
    %v719 = vpop.f32.mrf.mxu0
    %v720 = vadd.f32 %v631, %v719
    %721 = vmatmul.bf16.gmra.mxu0 %v458
    %v722 = vpop.f32.mrf.mxu0
    %v723 = vadd.f32 %v634, %v722
    %v724 = vpop.f32.mrf.mxu0
    %v725 = vadd.f32 %v636, %v724
    %726 = vmatmul.bf16.gmra.mxu0 %v460
    %v727 = vpop.f32.mrf.mxu0
    %v728 = vadd.f32 %v639, %v727
    %v729 = vpop.f32.mrf.mxu0
    %v730 = vadd.f32 %v641, %v729
    %731 = vmatmul.bf16.gmra.mxu0 %v462
    %v732 = vpop.f32.mrf.mxu0
    %v733 = vadd.f32 %v644, %v732
    %v734 = vpop.f32.mrf.mxu0
    %v735 = vadd.f32 %v646, %v734
    %736 = vmatmul.bf16.gmra.mxu0 %v464
    %v737 = vpop.f32.mrf.mxu0
    %v738 = vadd.f32 %v649, %v737
    %v739 = vpop.f32.mrf.mxu0
    %v740 = vadd.f32 %v651, %v739
    %741 = vmatmul.bf16.gmra.mxu0 %v466
    %v742 = vpop.f32.mrf.mxu0
    %v743 = vadd.f32 %v654, %v742
    %v744 = vpop.f32.mrf.mxu0
    %v745 = vadd.f32 %v656, %v744
    %746 = vmatmul.bf16.gmra.mxu0 %v468
    %v747 = vpop.f32.mrf.mxu0
    %v748 = vadd.f32 %v659, %v747
    %v749 = vpop.f32.mrf.mxu0
    %v750 = vadd.f32 %v661, %v749
    %751 = vmatmul.bf16.gmra.mxu0 %v470
    %v752 = vpop.f32.mrf.mxu0
    %v753 = vadd.f32 %v664, %v752
    %v754 = vpop.f32.mrf.mxu0
    %v755 = vadd.f32 %v666, %v754
    %756 = vmatmul.bf16.gmra.mxu0 %v472
    %v757 = vpop.f32.mrf.mxu0
    %v758 = vadd.f32 %v669, %v757
    %v759 = vpop.f32.mrf.mxu0
    %v760 = vadd.f32 %v671, %v759
    %761 = vmatmul.bf16.gmra.mxu0 %v474
    %v762 = vpop.f32.mrf.mxu0
    %v763 = vadd.f32 %v674, %v762
    %v764 = vpop.f32.mrf.mxu0
    %v765 = vadd.f32 %v676, %v764
    %766 = vmatmul.bf16.gmra.mxu0 %v476
    %v767 = vpop.f32.mrf.mxu0
    %v768 = vadd.f32 %v679, %v767
    %v769 = vpop.f32.mrf.mxu0
    %v770 = vadd.f32 %v681, %v769
    %771 = vmatmul.bf16.gmra.mxu0 %v478
    %v772 = vpop.f32.mrf.mxu0
    %v773 = vadd.f32 %v684, %v772
    %v774 = vpop.f32.mrf.mxu0
    %v775 = vadd.f32 %v686, %v774
    %776 = vmatmul.bf16.gmra.mxu0 %v480
    %v777 = vpop.f32.mrf.mxu0
    %v778 = vadd.f32 %v689, %v777
    %v779 = vpop.f32.mrf.mxu0
    %v780 = vadd.f32 %v691, %v779
    %781 = vmatmul.bf16.gmra.mxu0 %v482
    %v782 = vpop.f32.mrf.mxu0
    %v783 = vadd.f32 %v694, %v782
    %v784 = vpop.f32.mrf.mxu0
    %v785 = vadd.f32 %v696, %v784
    %786 = vmatmul.bf16.gmra.mxu0 %v484
    %v787 = vpop.f32.mrf.mxu0
    %v788 = vadd.f32 %v699, %v787
    %v789 = vpop.f32.mrf.mxu0
    %v790 = vadd.f32 %v701, %v789
    %791 = vmatmul.bf16.gmra.mxu0 %v486
    %v792 = vpop.f32.mrf.mxu0
    %v793 = vadd.f32 %v704, %v792
    %v794 = vpop.f32.mrf.mxu0
    %v795 = vadd.f32 %v706, %v794
    %796 = vdwg.mxu0
    %797 = vmax.xlane.f32.xlu0 %v718
    %v798 = vpop.xlane.xlu0 %797
    %799 = vmax.xlane.f32.xlu0 %v720
    %v800 = vpop.xlane.xlu0 %799
    %801 = vmax.xlane.f32.xlu0 %v723
    %v802 = vpop.xlane.xlu0 %801
    %803 = vmax.xlane.f32.xlu0 %v725
    %v804 = vpop.xlane.xlu0 %803
    %805 = vmax.xlane.f32.xlu0 %v728
    %v806 = vpop.xlane.xlu0 %805
    %807 = vmax.xlane.f32.xlu0 %v730
    %v808 = vpop.xlane.xlu0 %807
    %809 = vmax.xlane.f32.xlu0 %v733
    %v810 = vpop.xlane.xlu0 %809
    %811 = vmax.xlane.f32.xlu0 %v735
    %v812 = vpop.xlane.xlu0 %811
    %813 = vmax.xlane.f32.xlu0 %v738
    %v814 = vpop.xlane.xlu0 %813
    %815 = vmax.xlane.f32.xlu0 %v740
    %v816 = vpop.xlane.xlu0 %815
    %817 = vmax.xlane.f32.xlu0 %v743
    %v818 = vpop.xlane.xlu0 %817
    %819 = vmax.xlane.f32.xlu0 %v745
    %v820 = vpop.xlane.xlu0 %819
    %821 = vmax.xlane.f32.xlu0 %v748
    %v822 = vpop.xlane.xlu0 %821
    %823 = vmax.xlane.f32.xlu0 %v750
    %v824 = vpop.xlane.xlu0 %823
    %825 = vmax.xlane.f32.xlu0 %v753
    %v826 = vpop.xlane.xlu0 %825
    %827 = vmax.xlane.f32.xlu0 %v755
    %v828 = vpop.xlane.xlu0 %827
    %829 = vmax.xlane.f32.xlu0 %v758
    %v830 = vpop.xlane.xlu0 %829
    %831 = vmax.xlane.f32.xlu0 %v760
    %v832 = vpop.xlane.xlu0 %831
    %833 = vmax.xlane.f32.xlu0 %v763
    %v834 = vpop.xlane.xlu0 %833
    %835 = vmax.xlane.f32.xlu0 %v765
    %v836 = vpop.xlane.xlu0 %835
    %837 = vmax.xlane.f32.xlu0 %v768
    %v838 = vpop.xlane.xlu0 %837
    %839 = vmax.xlane.f32.xlu0 %v770
    %v840 = vpop.xlane.xlu0 %839
    %841 = vmax.xlane.f32.xlu0 %v773
    %v842 = vpop.xlane.xlu0 %841
    %843 = vmax.xlane.f32.xlu0 %v775
    %v844 = vpop.xlane.xlu0 %843
    %845 = vmax.xlane.f32.xlu0 %v778
    %v846 = vpop.xlane.xlu0 %845
    %847 = vmax.xlane.f32.xlu0 %v780
    %v848 = vpop.xlane.xlu0 %847
    %849 = vmax.xlane.f32.xlu0 %v783
    %v850 = vpop.xlane.xlu0 %849
    %851 = vmax.xlane.f32.xlu0 %v785
    %v852 = vpop.xlane.xlu0 %851
    %853 = vmax.xlane.f32.xlu0 %v788
    %v854 = vpop.xlane.xlu0 %853
    %855 = vmax.xlane.f32.xlu0 %v790
    %v856 = vpop.xlane.xlu0 %855
    %857 = vmax.xlane.f32.xlu0 %v793
    %v858 = vpop.xlane.xlu0 %857
    %859 = vmax.xlane.f32.xlu0 %v795
    %v860 = vpop.xlane.xlu0 %859
    %v861 = vsub.f32 %v718, %v798
    %v862 = vsub.f32 %v720, %v800
    %v863 = vsub.f32 %v723, %v802
    %v864 = vsub.f32 %v725, %v804
    %v865 = vsub.f32 %v728, %v806
    %v866 = vsub.f32 %v730, %v808
    %v867 = vsub.f32 %v733, %v810
    %v868 = vsub.f32 %v735, %v812
    %v869 = vsub.f32 %v738, %v814
    %v870 = vsub.f32 %v740, %v816
    %v871 = vsub.f32 %v743, %v818
    %v872 = vsub.f32 %v745, %v820
    %v873 = vsub.f32 %v748, %v822
    %v874 = vsub.f32 %v750, %v824
    %v875 = vsub.f32 %v753, %v826
    %v876 = vsub.f32 %v755, %v828
    %v877 = vsub.f32 %v758, %v830
    %v878 = vsub.f32 %v760, %v832
    %v879 = vsub.f32 %v763, %v834
    %v880 = vsub.f32 %v765, %v836
    %v881 = vsub.f32 %v768, %v838
    %v882 = vsub.f32 %v770, %v840
    %v883 = vsub.f32 %v773, %v842
    %v884 = vsub.f32 %v775, %v844
    %v885 = vsub.f32 %v778, %v846
    %v886 = vsub.f32 %v780, %v848
    %v887 = vsub.f32 %v783, %v850
    %v888 = vsub.f32 %v785, %v852
    %v889 = vsub.f32 %v788, %v854
    %v890 = vsub.f32 %v790, %v856
    %v891 = vsub.f32 %v793, %v858
    %v892 = vsub.f32 %v795, %v860
    %v893 = vmul.f32 %v861, 1.442695
    %v894 = vpow.pop %v893
    %v895 = vmul.f32 %v862, 1.442695
    %v896 = vpow.pop %v895
    %v897 = vmul.f32 %v863, 1.442695
    %v898 = vpow.pop %v897
    %v899 = vmul.f32 %v864, 1.442695
    %v900 = vpow.pop %v899
    %v901 = vmul.f32 %v865, 1.442695
    %v902 = vpow.pop %v901
    %v903 = vmul.f32 %v866, 1.442695
    %v904 = vpow.pop %v903
    %v905 = vmul.f32 %v867, 1.442695
    %v906 = vpow.pop %v905
    %v907 = vmul.f32 %v868, 1.442695
    %v908 = vpow.pop %v907
    %v909 = vmul.f32 %v869, 1.442695
    %v910 = vpow.pop %v909
    %v911 = vmul.f32 %v870, 1.442695
    %v912 = vpow.pop %v911
    %v913 = vmul.f32 %v871, 1.442695
    %v914 = vpow.pop %v913
    %v915 = vmul.f32 %v872, 1.442695
    %v916 = vpow.pop %v915
    %v917 = vmul.f32 %v873, 1.442695
    %v918 = vpow.pop %v917
    %v919 = vmul.f32 %v874, 1.442695
    %v920 = vpow.pop %v919
    %v921 = vmul.f32 %v875, 1.442695
    %v922 = vpow.pop %v921
    %v923 = vmul.f32 %v876, 1.442695
    %v924 = vpow.pop %v923
    %v925 = vmul.f32 %v877, 1.442695
    %v926 = vpow.pop %v925
    %v927 = vmul.f32 %v878, 1.442695
    %v928 = vpow.pop %v927
    %v929 = vmul.f32 %v879, 1.442695
    %v930 = vpow.pop %v929
    %v931 = vmul.f32 %v880, 1.442695
    %v932 = vpow.pop %v931
    %v933 = vmul.f32 %v881, 1.442695
    %v934 = vpow.pop %v933
    %v935 = vmul.f32 %v882, 1.442695
    %v936 = vpow.pop %v935
    %v937 = vmul.f32 %v883, 1.442695
    %v938 = vpow.pop %v937
    %v939 = vmul.f32 %v884, 1.442695
    %v940 = vpow.pop %v939
    %v941 = vmul.f32 %v885, 1.442695
    %v942 = vpow.pop %v941
    %v943 = vmul.f32 %v886, 1.442695
    %v944 = vpow.pop %v943
    %v945 = vmul.f32 %v887, 1.442695
    %v946 = vpow.pop %v945
    %v947 = vmul.f32 %v888, 1.442695
    %v948 = vpow.pop %v947
    %v949 = vmul.f32 %v889, 1.442695
    %v950 = vpow.pop %v949
    %v951 = vmul.f32 %v890, 1.442695
    %v952 = vpow.pop %v951
    %v953 = vmul.f32 %v891, 1.442695
    %v954 = vpow.pop %v953
    %v955 = vmul.f32 %v892, 1.442695
    %v956 = vpow.pop %v955
    %957 = vadd.xlane.f32.xlu0 %v894
    %v958 = vpop.xlane.xlu0 %957
    %959 = vadd.xlane.f32.xlu0 %v896
    %v960 = vpop.xlane.xlu0 %959
    %961 = vadd.xlane.f32.xlu0 %v898
    %v962 = vpop.xlane.xlu0 %961
    %963 = vadd.xlane.f32.xlu0 %v900
    %v964 = vpop.xlane.xlu0 %963
    %965 = vadd.xlane.f32.xlu0 %v902
    %v966 = vpop.xlane.xlu0 %965
    %967 = vadd.xlane.f32.xlu0 %v904
    %v968 = vpop.xlane.xlu0 %967
    %969 = vadd.xlane.f32.xlu0 %v906
    %v970 = vpop.xlane.xlu0 %969
    %971 = vadd.xlane.f32.xlu0 %v908
    %v972 = vpop.xlane.xlu0 %971
    %973 = vadd.xlane.f32.xlu0 %v910
    %v974 = vpop.xlane.xlu0 %973
    %975 = vadd.xlane.f32.xlu0 %v912
    %v976 = vpop.xlane.xlu0 %975
    %977 = vadd.xlane.f32.xlu0 %v914
    %v978 = vpop.xlane.xlu0 %977
    %979 = vadd.xlane.f32.xlu0 %v916
    %v980 = vpop.xlane.xlu0 %979
    %981 = vadd.xlane.f32.xlu0 %v918
    %v982 = vpop.xlane.xlu0 %981
    %983 = vadd.xlane.f32.xlu0 %v920
    %v984 = vpop.xlane.xlu0 %983
    %985 = vadd.xlane.f32.xlu0 %v922
    %v986 = vpop.xlane.xlu0 %985
    %987 = vadd.xlane.f32.xlu0 %v924
    %v988 = vpop.xlane.xlu0 %987
    %989 = vadd.xlane.f32.xlu0 %v926
    %v990 = vpop.xlane.xlu0 %989
    %991 = vadd.xlane.f32.xlu0 %v928
    %v992 = vpop.xlane.xlu0 %991
    %993 = vadd.xlane.f32.xlu0 %v930
    %v994 = vpop.xlane.xlu0 %993
    %995 = vadd.xlane.f32.xlu0 %v932
    %v996 = vpop.xlane.xlu0 %995
    %997 = vadd.xlane.f32.xlu0 %v934
    %v998 = vpop.xlane.xlu0 %997
    %999 = vadd.xlane.f32.xlu0 %v936
    %v1000 = vpop.xlane.xlu0 %999
    %1001 = vadd.xlane.f32.xlu0 %v938
    %v1002 = vpop.xlane.xlu0 %1001
    %1003 = vadd.xlane.f32.xlu0 %v940
    %v1004 = vpop.xlane.xlu0 %1003
    %1005 = vadd.xlane.f32.xlu0 %v942
    %v1006 = vpop.xlane.xlu0 %1005
    %1007 = vadd.xlane.f32.xlu0 %v944
    %v1008 = vpop.xlane.xlu0 %1007
    %1009 = vadd.xlane.f32.xlu0 %v946
    %v1010 = vpop.xlane.xlu0 %1009
    %1011 = vadd.xlane.f32.xlu0 %v948
    %v1012 = vpop.xlane.xlu0 %1011
    %1013 = vadd.xlane.f32.xlu0 %v950
    %v1014 = vpop.xlane.xlu0 %1013
    %1015 = vadd.xlane.f32.xlu0 %v952
    %v1016 = vpop.xlane.xlu0 %1015
    %1017 = vadd.xlane.f32.xlu0 %v954
    %v1018 = vpop.xlane.xlu0 %1017
    %1019 = vadd.xlane.f32.xlu0 %v956
    %v1020 = vpop.xlane.xlu0 %1019
    %v1021 = vrcp.pop %v958
    %v1022 = vrcp.pop %v960
    %v1023 = vrcp.pop %v962
    %v1024 = vrcp.pop %v964
    %v1025 = vrcp.pop %v966
    %v1026 = vrcp.pop %v968
    %v1027 = vrcp.pop %v970
    %v1028 = vrcp.pop %v972
    %v1029 = vrcp.pop %v974
    %v1030 = vrcp.pop %v976
    %v1031 = vrcp.pop %v978
    %v1032 = vrcp.pop %v980
    %v1033 = vrcp.pop %v982
    %v1034 = vrcp.pop %v984
    %v1035 = vrcp.pop %v986
    %v1036 = vrcp.pop %v988
    %v1037 = vrcp.pop %v990
    %v1038 = vrcp.pop %v992
    %v1039 = vrcp.pop %v994
    %v1040 = vrcp.pop %v996
    %v1041 = vrcp.pop %v998
    %v1042 = vrcp.pop %v1000
    %v1043 = vrcp.pop %v1002
    %v1044 = vrcp.pop %v1004
    %v1045 = vrcp.pop %v1006
    %v1046 = vrcp.pop %v1008
    %v1047 = vrcp.pop %v1010
    %v1048 = vrcp.pop %v1012
    %v1049 = vrcp.pop %v1014
    %v1050 = vrcp.pop %v1016
    %v1051 = vrcp.pop %v1018
    %v1052 = vrcp.pop %v1020
    %v1053 = vmul.f32 %v894, %v1021
    %v1054 = vmul.f32 %v896, %v1022
    %v1055 = vmul.f32 %v898, %v1023
    %v1056 = vmul.f32 %v900, %v1024
    %v1057 = vmul.f32 %v902, %v1025
    %v1058 = vmul.f32 %v904, %v1026
    %v1059 = vmul.f32 %v906, %v1027
    %v1060 = vmul.f32 %v908, %v1028
    %v1061 = vmul.f32 %v910, %v1029
    %v1062 = vmul.f32 %v912, %v1030
    %v1063 = vmul.f32 %v914, %v1031
    %v1064 = vmul.f32 %v916, %v1032
    %v1065 = vmul.f32 %v918, %v1033
    %v1066 = vmul.f32 %v920, %v1034
    %v1067 = vmul.f32 %v922, %v1035
    %v1068 = vmul.f32 %v924, %v1036
    %v1069 = vmul.f32 %v926, %v1037
    %v1070 = vmul.f32 %v928, %v1038
    %v1071 = vmul.f32 %v930, %v1039
    %v1072 = vmul.f32 %v932, %v1040
    %v1073 = vmul.f32 %v934, %v1041
    %v1074 = vmul.f32 %v936, %v1042
    %v1075 = vmul.f32 %v938, %v1043
    %v1076 = vmul.f32 %v940, %v1044
    %v1077 = vmul.f32 %v942, %v1045
    %v1078 = vmul.f32 %v944, %v1046
    %v1079 = vmul.f32 %v946, %v1047
    %v1080 = vmul.f32 %v948, %v1048
    %v1081 = vmul.f32 %v950, %v1049
    %v1082 = vmul.f32 %v952, %v1050
    %v1083 = vmul.f32 %v954, %v1051
    %v1084 = vmul.f32 %v956, %v1052
    %1085 = vst [vmem:[#allocation2] sm:$0xff] %v1053
    %1086 = vst [vmem:[#allocation2 + $0x8] sm:$0xff] %v1054
    %1087 = vst [vmem:[#allocation2 + $0x10] sm:$0xff] %v1055
    %1088 = vst [vmem:[#allocation2 + $0x18] sm:$0xff] %v1056
    %1089 = vst [vmem:[#allocation2 + $0x20] sm:$0xff] %v1057
    %1090 = vst [vmem:[#allocation2 + $0x28] sm:$0xff] %v1058
    %1091 = vst [vmem:[#allocation2 + $0x30] sm:$0xff] %v1059
    %1092 = vst [vmem:[#allocation2 + $0x38] sm:$0xff] %v1060
    %1093 = vst [vmem:[#allocation2 + $0x40] sm:$0xff] %v1061
    %1094 = vst [vmem:[#allocation2 + $0x48] sm:$0xff] %v1062
    %1095 = vst [vmem:[#allocation2 + $0x50] sm:$0xff] %v1063
    %1096 = vst [vmem:[#allocation2 + $0x58] sm:$0xff] %v1064
    %1097 = vst [vmem:[#allocation2 + $0x60] sm:$0xff] %v1065
    %1098 = vst [vmem:[#allocation2 + $0x68] sm:$0xff] %v1066
    %1099 = vst [vmem:[#allocation2 + $0x70] sm:$0xff] %v1067
    %1100 = vst [vmem:[#allocation2 + $0x78] sm:$0xff] %v1068
    %1101 = vst [vmem:[#allocation2 + $0x80] sm:$0xff] %v1069
    %1102 = vst [vmem:[#allocation2 + $0x88] sm:$0xff] %v1070
    %1103 = vst [vmem:[#allocation2 + $0x90] sm:$0xff] %v1071
    %1104 = vst [vmem:[#allocation2 + $0x98] sm:$0xff] %v1072
    %1105 = vst [vmem:[#allocation2 + $0xa0] sm:$0xff] %v1073
    %1106 = vst [vmem:[#allocation2 + $0xa8] sm:$0xff] %v1074
    %1107 = vst [vmem:[#allocation2 + $0xb0] sm:$0xff] %v1075
    %1108 = vst [vmem:[#allocation2 + $0xb8] sm:$0xff] %v1076
    %1109 = vst [vmem:[#allocation2 + $0xc0] sm:$0xff] %v1077
    %1110 = vst [vmem:[#allocation2 + $0xc8] sm:$0xff] %v1078
    %1111 = vst [vmem:[#allocation2 + $0xd0] sm:$0xff] %v1079
    %1112 = vst [vmem:[#allocation2 + $0xd8] sm:$0xff] %v1080
    %1113 = vst [vmem:[#allocation2 + $0xe0] sm:$0xff] %v1081
    %1114 = vst [vmem:[#allocation2 + $0xe8] sm:$0xff] %v1082
    %1115 = vst [vmem:[#allocation2 + $0xf0] sm:$0xff] %v1083
    %1116 = vst [vmem:[#allocation2 + $0xf8] sm:$0xff] %v1084
    // Predicated region
    $region22: #{tpu_custom_call.1} parent=1 // pred_check
      _
    $region23: #{tpu_custom_call.1} parent=1 // pred_check_branch
      %1118 = sbr.rel (0) target = $region25
    $region24: #{tpu_custom_call.1} parent=1 // pred_region
      %1120 = vsyncadd [#allocation3], 0
      %s1121 = sshll.u32 [#allocation2], 4
      %s1122 = int_to_ptr.vmem [resolvable:$true] %s1121
      %s1123 = sshll.u32 %s5, 4
      %s1124 = int_to_ptr.hbm [resolvable:$true] %s1123
      %1129 = dma.vmem_to_hbm [thread:$0]  %s1122, 4096, %s1124, [#allocation3], 128, 128, 8
    $region25: #{tpu_custom_call.1} parent=1 // pred_fallthru
      _
    // Predicated region
    $region26: #{tpu_custom_call.1} parent=1 // pred_check
      _
    $region27: #{tpu_custom_call.1} parent=1 // pred_check_branch
      %1131 = sbr.rel (0) target = $region29
    $region28: #{tpu_custom_call.1} parent=1 // pred_region
      %1133 = dma.done [#allocation3], 4096
    $region29: #{tpu_custom_call.1} parent=1 // pred_fallthru
      _
    %1134 = vsyncpa [#allocation3], 1

</llo_original>
